<compile_context>
chip_gen: v7x
topology: tpu7x:2x2x1
jax: 0.10.0
libtpu: 0.0.40
codegen_flags: <defaults>
</compile_context>

<pallas_src>
import functools

import jax
import jax.numpy as jnp
from jax.experimental import pallas as pl
from jax.experimental.pallas import tpu as pltpu

ALPHA = 0.75
GAMMA = 1.5          # hard-wired in the kernel as t * sqrt(t)

LANE = 128           # TPU lane width
SUBLANE = 8          # f32 sublane packing


def _round_up(x, m):
    return ((x + m - 1) // m) * m


def _focal_loss_kernel(x_ref, z_ref, out_ref, acc_ref, *,
                       n_valid, tile_rows, tiles_per_part):
    c = pl.program_id(0)            # "parallel" partial-sum axis
    i = pl.program_id(1)            # "arbitrary" reduction axis

    @pl.when(i == 0)
    def _init():
        acc_ref[...] = jnp.zeros_like(acc_ref)

    x = x_ref[...].astype(jnp.float32)
    z = z_ref[...].astype(jnp.float32)

    # One shared exp(-|x|) feeds both the sigmoid and the stable BCE term.
    e = jnp.exp(-jnp.abs(x))
    d = 1.0 + e
    r = pl.reciprocal(d, approx=True)
    r = r * (2.0 - d * r)                     # Newton step -> ~full f32 precision
    p = jnp.where(x >= 0.0, r, e * r)         # sigmoid(x)

    # Numerically stable binary_cross_entropy_with_logits (reduction='none').
    bce = jnp.maximum(x, 0.0) - x * z + jnp.log1p(e)

    # pt = p if target==1 else 1-p  (mul/add form; exact for 0/1 targets).
    pt = p * z + (1.0 - p) * (1.0 - z)
    t = 1.0 - pt
    loss = (ALPHA * t * jnp.sqrt(t)) * bce    # t**1.5 == t*sqrt(t): 1 EUP + 1 mul

    # Mask lane/row padding so it does not bias the mean.
    # (int32 flat index -> fine for < 2**31 elements.)
    g = c * tiles_per_part + i                # global row-tile index
    row = jax.lax.broadcasted_iota(jnp.int32, loss.shape, 0)
    lane = jax.lax.broadcasted_iota(jnp.int32, loss.shape, 1)
    flat = (g * tile_rows + row) * LANE + lane
    loss = jnp.where(flat < n_valid, loss, 0.0)

    acc_ref[...] += jnp.sum(loss, keepdims=True)

    @pl.when(i == pl.num_programs(1) - 1)
    def _finalize():
        # Broadcast the per-part partial sum into a full (8,128) tile so the
        # store is an unmasked, lane-dense vst.
        out_ref[...] = jnp.broadcast_to(acc_ref[...], (SUBLANE, LANE))


def focal_loss(logits, targets, *, tile_rows=2048):
    """Mean binary focal loss with logits (alpha=0.75, gamma=1.5).

    logits, targets: same shape, e.g. (batch, n_class).  Returns f32 scalar.
    """
    assert logits.shape == targets.shape
    total = 1
    for s in logits.shape:
        total *= int(s)

    # Lane-dense slab: flatten, pad, view as (padded_rows, 128).
    rows = pl.cdiv(total, LANE)
    tile_rows = _round_up(
        max(SUBLANE, min(tile_rows, _round_up(rows, SUBLANE))), SUBLANE)
    num_tiles = pl.cdiv(rows, tile_rows)
    num_parts = 2 if num_tiles >= 2 else 1     # per-core partial sums (v7x 2 TC)
    num_tiles = _round_up(num_tiles, num_parts)
    tiles_per_part = num_tiles // num_parts
    padded_rows = num_tiles * tile_rows
    pad = padded_rows * LANE - total

    # Keep the caller's dtype for the HBM->VMEM DMA (bf16 inputs halve traffic);
    # compute is f32 inside the kernel.
    x = jnp.pad(logits.reshape(-1), (0, pad)).reshape(padded_rows, LANE)
    z = jnp.pad(targets.reshape(-1), (0, pad)).reshape(padded_rows, LANE)

    kernel = functools.partial(
        _focal_loss_kernel,
        n_valid=total, tile_rows=tile_rows, tiles_per_part=tiles_per_part)

    in_map = lambda c, i: (c * tiles_per_part + i, 0)
    grid_spec = pltpu.PrefetchScalarGridSpec(
        num_scalar_prefetch=0,
        grid=(num_parts, tiles_per_part),
        in_specs=[
            pl.BlockSpec((tile_rows, LANE), in_map),
            pl.BlockSpec((tile_rows, LANE), in_map),
        ],
        out_specs=pl.BlockSpec((SUBLANE, LANE), lambda c, i: (c, 0)),
        scratch_shapes=[pltpu.VMEM((1, 1), jnp.float32)],
    )

    out = pl.pallas_call(
        kernel,
        out_shape=jax.ShapeDtypeStruct((num_parts * SUBLANE, LANE), jnp.float32),
        grid_spec=grid_spec,
        compiler_params=pltpu.CompilerParams(
            dimension_semantics=("parallel", "arbitrary")),
    )(x, z)

    partials = out.reshape(num_parts, SUBLANE, LANE)[:, 0, 0]   # (num_parts,)
    return jnp.sum(partials) * (1.0 / total)


def focal_loss_ref(logits, targets):
    """Pure-JAX reference mirroring the PyTorch forward (reduction='mean')."""
    x = logits.astype(jnp.float32)
    z = targets.astype(jnp.float32)
    bce = jnp.maximum(x, 0.0) - x * z + jnp.log1p(jnp.exp(-jnp.abs(x)))
    p = jax.nn.sigmoid(x)
    pt = jnp.where(z == 1.0, p, 1.0 - p)
    return jnp.mean(ALPHA * jnp.power(1.0 - pt, GAMMA) * bce)


if __name__ == "__main__":
    key = jax.random.PRNGKey(0)
    k1, k2, k3, k4 = jax.random.split(key, 4)

    # Small shape consistent with the module: (batch=8, n_class=16).
    logits = jax.random.normal(k1, (8, 16), dtype=jnp.float32) * 2.0
    targets = (jax.random.uniform(k2, (8, 16)) > 0.5).astype(jnp.float32)
    loss = focal_loss(logits, targets)
    jax.block_until_ready(loss)
    ref = focal_loss_ref(logits, targets)
    assert jnp.allclose(loss, ref, rtol=1e-4, atol=1e-6), (loss, ref)

    # Second small case exercising multiple row-tiles, both partial-sum slots
    # and the padding mask (tile_rows forced small on purpose).
    logits2 = jax.random.normal(k3, (40, 100), dtype=jnp.float32) * 3.0
    targets2 = (jax.random.uniform(k4, (40, 100)) > 0.5).astype(jnp.float32)
    loss2 = focal_loss(logits2, targets2, tile_rows=8)
    jax.block_until_ready(loss2)
    ref2 = focal_loss_ref(logits2, targets2)
    assert jnp.allclose(loss2, ref2, rtol=1e-4, atol=1e-6), (loss2, ref2)

    print("KERNEL_OK")
</pallas_src>

<mosaic_0001>
module attributes {stable_mosaic.version = 11 : i64} {
  func.func @_focal_loss_kernel(%arg0: i32, %arg1: i32, %arg2: memref<8x128xf32, #tpu.memory_space<vmem>>, %arg3: memref<8x128xf32, #tpu.memory_space<vmem>>, %arg4: memref<8x128xf32, #tpu.memory_space<vmem>>, %arg5: memref<1x1xf32, #tpu.memory_space<vmem>>) attributes {dimension_semantics = [#tpu.dimension_semantics<parallel>, #tpu.dimension_semantics<arbitrary>], iteration_bounds = array<i64: 1, 1>, scalar_prefetch = 0 : i64, scratch_operands = 1 : i64, tpu.core_type = #tpu.core_type<tc>, window_params = [{transform_indices = @transform_0, window_bounds = array<i64: 8, 128>}, {transform_indices = @transform_1, window_bounds = array<i64: 8, 128>}, {transform_indices = @transform_2, window_bounds = array<i64: 8, 128>}]} {
    %c0_i32 = arith.constant 0 : i32
    %0 = arith.cmpi eq, %arg1, %c0_i32 : i32
    %1 = arith.extui %0 : i1 to i32
    %c0_i32_0 = arith.constant 0 : i32
    %2 = arith.cmpi ne, %1, %c0_i32_0 : i32
    scf.if %2 {
      %cst_21 = arith.constant 0.000000e+00 : f32
      %65 = vector.broadcast %cst_21 : f32 to vector<1x1xf32>
      %c0_22 = arith.constant 0 : index
      %c0_23 = arith.constant 0 : index
      %66 = vector.load %arg5[%c0_22, %c0_23] : memref<1x1xf32, #tpu.memory_space<vmem>>, vector<1x1xf32>
      tpu.vector_store %arg5[%c0_22, %c0_23], %65 {strides = array<i32>} : memref<1x1xf32, #tpu.memory_space<vmem>>, vector<1x1xf32>,
    } else {
    }
    %c0 = arith.constant 0 : index
    %c0_1 = arith.constant 0 : index
    %3 = vector.load %arg2[%c0, %c0_1] : memref<8x128xf32, #tpu.memory_space<vmem>>, vector<8x128xf32>
    %c0_2 = arith.constant 0 : index
    %c0_3 = arith.constant 0 : index
    %4 = vector.load %arg3[%c0_2, %c0_3] : memref<8x128xf32, #tpu.memory_space<vmem>>, vector<8x128xf32>
    %5 = math.absf %3 : vector<8x128xf32>
    %cst = arith.constant 0.000000e+00 : f32
    %6 = vector.broadcast %cst : f32 to vector<8x128xf32>
    %7 = arith.subf %6, %5 : vector<8x128xf32>
    %8 = math.exp %7 : vector<8x128xf32>
    %cst_4 = arith.constant 1.000000e+00 : f32
    %9 = vector.broadcast %cst_4 : f32 to vector<8x128xf32>
    %10 = arith.addf %9, %8 : vector<8x128xf32>
    %11 = tpu.reciprocal %10 {approx = true} : vector<8x128xf32> -> vector<8x128xf32>
    %12 = arith.mulf %10, %11 : vector<8x128xf32>
    %cst_5 = arith.constant 2.000000e+00 : f32
    %13 = vector.broadcast %cst_5 : f32 to vector<8x128xf32>
    %14 = arith.subf %13, %12 : vector<8x128xf32>
    %15 = arith.mulf %11, %14 : vector<8x128xf32>
    %cst_6 = arith.constant 0.000000e+00 : f32
    %16 = vector.broadcast %cst_6 : f32 to vector<8x128xf32>
    %17 = arith.cmpf oge, %3, %16 : vector<8x128xf32>
    %18 = arith.mulf %8, %15 : vector<8x128xf32>
    %19 = arith.select %17, %15, %18 : vector<8x128xi1>, vector<8x128xf32>
    %cst_7 = arith.constant 0.000000e+00 : f32
    %20 = vector.broadcast %cst_7 : f32 to vector<8x128xf32>
    %21 = arith.maximumf %3, %20 : vector<8x128xf32>
    %22 = arith.mulf %3, %4 : vector<8x128xf32>
    %23 = arith.subf %21, %22 : vector<8x128xf32>
    %24 = math.log1p %8 : vector<8x128xf32>
    %25 = arith.addf %23, %24 : vector<8x128xf32>
    %26 = arith.mulf %19, %4 : vector<8x128xf32>
    %cst_8 = arith.constant 1.000000e+00 : f32
    %27 = vector.broadcast %cst_8 : f32 to vector<8x128xf32>
    %28 = arith.subf %27, %19 : vector<8x128xf32>
    %cst_9 = arith.constant 1.000000e+00 : f32
    %29 = vector.broadcast %cst_9 : f32 to vector<8x128xf32>
    %30 = arith.subf %29, %4 : vector<8x128xf32>
    %31 = arith.mulf %28, %30 : vector<8x128xf32>
    %32 = arith.addf %26, %31 : vector<8x128xf32>
    %cst_10 = arith.constant 1.000000e+00 : f32
    %33 = vector.broadcast %cst_10 : f32 to vector<8x128xf32>
    %34 = arith.subf %33, %32 : vector<8x128xf32>
    %cst_11 = arith.constant 7.500000e-01 : f32
    %35 = vector.broadcast %cst_11 : f32 to vector<8x128xf32>
    %36 = arith.mulf %35, %34 : vector<8x128xf32>
    %37 = math.sqrt %34 : vector<8x128xf32>
    %38 = arith.mulf %36, %37 : vector<8x128xf32>
    %39 = arith.mulf %38, %25 : vector<8x128xf32>
    %c1_i32 = arith.constant 1 : i32
    %40 = arith.muli %arg0, %c1_i32 : i32
    %41 = arith.addi %40, %arg1 : i32
    %42 = tpu.iota {dimensions = array<i32: 0>} : vector<8x128xi32>
    %43 = tpu.iota {dimensions = array<i32: 1>} : vector<8x128xi32>
    %c8_i32 = arith.constant 8 : i32
    %44 = arith.muli %41, %c8_i32 : i32
    %45 = vector.broadcast %44 : i32 to vector<8x128xi32>
    %46 = arith.addi %45, %42 : vector<8x128xi32>
    %c128_i32 = arith.constant 128 : i32
    %47 = vector.broadcast %c128_i32 : i32 to vector<8x128xi32>
    %48 = arith.muli %46, %47 : vector<8x128xi32>
    %49 = arith.addi %48, %43 : vector<8x128xi32>
    %c128_i32_12 = arith.constant 128 : i32
    %50 = vector.broadcast %c128_i32_12 : i32 to vector<8x128xi32>
    %51 = arith.cmpi slt, %49, %50 : vector<8x128xi32>
    %cst_13 = arith.constant 0.000000e+00 : f32
    %52 = vector.broadcast %cst_13 : f32 to vector<8x128xf32>
    %53 = arith.select %51, %39, %52 : vector<8x128xi1>, vector<8x128xf32>
    %c0_14 = arith.constant 0 : index
    %c0_15 = arith.constant 0 : index
    %54 = vector.load %arg5[%c0_14, %c0_15] : memref<1x1xf32, #tpu.memory_space<vmem>>, vector<1x1xf32>
    %55 = vector.shape_cast %53 : vector<8x128xf32> to vector<1x8x128xf32>
    %cst_16 = arith.constant dense<0.000000e+00> : vector<1xf32>
    %56 = vector.multi_reduction <add>, %55, %cst_16 [1, 2] : vector<1x8x128xf32> to vector<1xf32>
    %57 = vector.shape_cast %56 : vector<1xf32> to vector<1x1x1xf32>
    %58 = vector.extract %57[0, 0, 0] : f32 from vector<1x1x1xf32>
    %59 = vector.broadcast %58 : f32 to vector<1x1xf32>
    %60 = arith.addf %54, %59 : vector<1x1xf32>
    %c0_17 = arith.constant 0 : index
    %c0_18 = arith.constant 0 : index
    %61 = vector.load %arg5[%c0_17, %c0_18] : memref<1x1xf32, #tpu.memory_space<vmem>>, vector<1x1xf32>
    tpu.vector_store %arg5[%c0_17, %c0_18], %60 {strides = array<i32>} : memref<1x1xf32, #tpu.memory_space<vmem>>, vector<1x1xf32>,
    %c0_i32_19 = arith.constant 0 : i32
    %62 = arith.cmpi eq, %arg1, %c0_i32_19 : i32
    %63 = arith.extui %62 : i1 to i32
    %c0_i32_20 = arith.constant 0 : i32
    %64 = arith.cmpi ne, %63, %c0_i32_20 : i32
    scf.if %64 {
      %c0_21 = arith.constant 0 : index
      %c0_22 = arith.constant 0 : index
      %65 = vector.load %arg5[%c0_21, %c0_22] : memref<1x1xf32, #tpu.memory_space<vmem>>, vector<1x1xf32>
      %66 = vector.shape_cast %65 : vector<1x1xf32> to vector<1x1xf32>
      %67 = vector.broadcast %66 : vector<1x1xf32> to vector<8x128xf32>
      %c0_23 = arith.constant 0 : index
      %c0_24 = arith.constant 0 : index
      %68 = vector.load %arg4[%c0_23, %c0_24] : memref<8x128xf32, #tpu.memory_space<vmem>>, vector<8x128xf32>
      tpu.vector_store %arg4[%c0_23, %c0_24], %67 {strides = array<i32>} : memref<8x128xf32, #tpu.memory_space<vmem>>, vector<8x128xf32>,
    } else {
    }
    return
  }
  func.func @transform_0(%arg0: i32, %arg1: i32) -> (i32, i32) {
    %c1_i32 = arith.constant 1 : i32
    %0 = arith.muli %arg0, %c1_i32 : i32
    %1 = arith.addi %0, %arg1 : i32
    %c0_i32 = arith.constant 0 : i32
    %c0_i32_0 = arith.constant 0 : i32
    return %1, %c0_i32 : i32, i32
  }
  func.func @transform_1(%arg0: i32, %arg1: i32) -> (i32, i32) {
    %c1_i32 = arith.constant 1 : i32
    %0 = arith.muli %arg0, %c1_i32 : i32
    %1 = arith.addi %0, %arg1 : i32
    %c0_i32 = arith.constant 0 : i32
    %c0_i32_0 = arith.constant 0 : i32
    return %1, %c0_i32 : i32, i32
  }
  func.func @transform_2(%arg0: i32, %arg1: i32) -> (i32, i32) {
    %c0_i32 = arith.constant 0 : i32
    %c0_i32_0 = arith.constant 0 : i32
    return %arg0, %c0_i32 : i32, i32
  }
}

</mosaic_0001>

<llo_original>
// kernel: tpu_custom_call.1
$region0: #{tpu_custom_call.1}
  #allocation0 [shape = 'u32[]', space=smem, size = 0x4, offset = 0x4, fixed_abs, tag = 'smem constant byte address 0x4 - core index']
  #allocation1 [shape = 'u32[144,128]{1,0:T(1,128)}', space=vmem, size = 0x12000, scoped, tag = 'internal scratch']
  #allocation2 [shape = 'f32[1,1]{1,0:T(1,128)}', space=vmem, size = 0x200, scoped, tag = 'scratch operand']
  %s0 = inlined_call_operand.hbm [shape: f32[8,128], index: 0, kind: input, shape index: {}]
  %s1 = inlined_call_operand.hbm [shape: f32[8,128], index: 1, kind: input, shape index: {}]
  %s2 = inlined_call_operand.hbm [shape: f32[8,128], index: 2, kind: output, shape index: {}]
  %s3 = sld [smem:[#allocation0]]
  $region34: #{tpu_custom_call.1} parent=0
    _
  %s5 = ssub.s32 1, %s3
  %s6 = scalar_select 0, %s5, %s3
  $region1: #{tpu_custom_call.1} parent=0
    #allocation3 [shape = 'u8[4096]{0}', space=vmem, size = 0x1000, scoped, tag = 'input window, operand 0, single buffered']
    #allocation4 [shape = 's32[1]{0}', space=sflag, size = 0x4, scoped, tag = 'scoped memory for tpu_custom_call.1']
    #allocation5 [shape = 's32[1]{0}', space=sflag, size = 0x4, scoped, tag = 'scoped memory for tpu_custom_call.1']
    #allocation6 [shape = 'u8[4096]{0}', space=vmem, size = 0x1000, scoped, tag = 'input window, operand 1, single buffered']
    #allocation7 [shape = 's32[1]{0}', space=sflag, size = 0x4, scoped, tag = 'scoped memory for tpu_custom_call.1']
    #allocation8 [shape = 'u8[4096]{0}', space=vmem, size = 0x1000, scoped, tag = 'output window, operand 0, single buffered']
    %7 = vsyncpa [#allocation4], 0
    %8 = vsyncpa [#allocation7], 0
    %9 = vsyncpa [#allocation5], 0
    // Predicated region
    $region2: #{tpu_custom_call.1} parent=1 // pred_check
      _
    $region3: #{tpu_custom_call.1} parent=1 // pred_check_branch
      %11 = sbr.rel (0) target = $region5
    $region4: #{tpu_custom_call.1} parent=1 // pred_region
      %s12 = sadd.s32 0, 0
      %s14 = ssub.s32 128, 128
      %15 = vsyncadd [#allocation4], %s14
      %s16 = smul.addr %s12, 128
      %s17 = scalar_lea.hbm %s0, %s16
      %s19 = sshll.u32 [#allocation3], 4
      %s20 = int_to_ptr.vmem [resolvable:$true] %s19
      %22 = dma.hbm_to_vmem [thread:$0]  %s17, 128, %s20, [#allocation4]
    $region5: #{tpu_custom_call.1} parent=1 // pred_fallthru
      _
    // Predicated region
    $region6: #{tpu_custom_call.1} parent=1 // pred_check
      _
    $region7: #{tpu_custom_call.1} parent=1 // pred_check_branch
      %24 = sbr.rel (0) target = $region9
    $region8: #{tpu_custom_call.1} parent=1 // pred_region
      %s25 = sadd.s32 0, 0
      %s27 = ssub.s32 128, 128
      %28 = vsyncadd [#allocation7], %s27
      %s29 = smul.addr %s25, 128
      %s30 = scalar_lea.hbm %s1, %s29
      %s32 = sshll.u32 [#allocation6], 4
      %s33 = int_to_ptr.vmem [resolvable:$true] %s32
      %35 = dma.hbm_to_vmem [thread:$0]  %s30, 128, %s33, [#allocation7]
    $region9: #{tpu_custom_call.1} parent=1 // pred_fallthru
      _
    // Predicated region
    $region10: #{tpu_custom_call.1} parent=1 // pred_check
      _
    $region11: #{tpu_custom_call.1} parent=1 // pred_check_branch
      %37 = sbr.rel (0) target = $region13
    $region12: #{tpu_custom_call.1} parent=1 // pred_region
      %38 = dma.done [#allocation4], 128
    $region13: #{tpu_custom_call.1} parent=1 // pred_fallthru
      _
    // Predicated region
    $region14: #{tpu_custom_call.1} parent=1 // pred_check
      _
    $region15: #{tpu_custom_call.1} parent=1 // pred_check_branch
      %40 = sbr.rel (0) target = $region17
    $region16: #{tpu_custom_call.1} parent=1 // pred_region
      %41 = dma.done [#allocation7], 128
    $region17: #{tpu_custom_call.1} parent=1 // pred_fallthru
      _
    %s42 = sadd.s32 0, 0
    %s43 = sadd.s32 0, 0
    %p44 = scmp.eq.s32.totalorder 0, 0
    // Predicated region
    $region18: #{tpu_custom_call.1} parent=1 // pred_check
      %p45 = pneg %p44
    $region19: #{tpu_custom_call.1} parent=1 // pred_check_branch
      %47 = sbr.rel (%p45) target = $region21
    $region20: #{tpu_custom_call.1} parent=1 // pred_region
      %vm48 = vcmask 0
      %49 = vst.msk [vmem:[#allocation2] sm:$0x1] %vm48, 0.0
    $region21: #{tpu_custom_call.1} parent=1 // pred_fallthru
      _
    %v50 = vld [vmem:[#allocation3] sm:$0xff]
    %v51 = vld [vmem:[#allocation6] sm:$0xff]
    %v52 = vand.u32 2147483647, %v50
    %v53 = vsub.f32 0.0, %v52
    %v54 = vmul.f32 %v53, 1.442695
    %v55 = vpow.pop %v54
    %v56 = vadd.f32 %v55, 1.0
    %v57 = vrcp.pop %v56
    %v58 = vmul.f32 %v56, %v57
    %v59 = vsub.f32 2.0, %v58
    %v60 = vmul.f32 %v57, %v59
    %vm61 = vcmp.ge.f32.partialorder %v50, 0.0
    %v62 = vmul.f32 %v55, %v60
    %v63 = vsel %vm61, %v60, %v62
    %v64 = vmax.f32 %v50, 0.0
    %v65 = vmul.f32 %v50, %v51
    %v66 = vsub.f32 %v64, %v65
    %v67 = vadd.f32 %v55, 1.0
    %v68 = vlog2.pop %v67
    %v69 = vmul.f32 %v68, 0.6931472
    %v70 = vmul.f32 -0.5, %v55
    %v71 = vadd.f32 %v70, 1.0
    %v72 = vmul.f32 %v71, %v55
    %v73 = vand.u32 2147483647, %v55
    %vm74 = vcmp.lt.f32.partialorder %v73, 0.0004427343
    %v75 = vsel %vm74, %v72, %v69
    %v76 = vadd.f32 %v66, %v75
    %v77 = vmul.f32 %v63, %v51
    %v78 = vsub.f32 1.0, %v63
    %v79 = vsub.f32 1.0, %v51
    %v80 = vmul.f32 %v78, %v79
    %v81 = vadd.f32 %v77, %v80
    %v82 = vsub.f32 1.0, %v81
    %v83 = vmul.f32 %v82, 0.75
    %v84 = vrsqrt.pop %v82
    %v85 = vmul.f32 %v82, %v84
    %vm86 = vcmp.eq.f32.partialorder %v82, inf
    %v87 = vsel %vm86, %v82, %v85
    %vm88 = vcmp.eq.f32.partialorder %v82, 0.0
    %v89 = vand.u32 %v82, 2147483648
    %v90 = vsel %vm88, %v89, %v87
    %v91 = vmul.f32 %v83, %v90
    %v92 = vmul.f32 %v91, %v76
    %s93 = sadd.s32 0, 0
    %v94 = vlaneseq
    %v95 = vshrl.u32 %v94, 7
    %v96 = vlaneseq
    %v97 = vand.u32 %v96, 127
    %s98 = smul.u32 %s93, 8
    %v99 = vstv %s98
    %v100 = vadd.s32 %v99, %v95
    %v101 = vmul.u32 %v100, 128
    %v102 = vadd.s32 %v101, %v97
    %vm103 = vcmp.lt.s32.totalorder %v102, 128
    %v104 = vsel %vm103, %v92, 0.0
    %v105 = vld [vmem:[#allocation2] sm:$0x1]
    %106 = vadd.xlane.f32.xlu0 %v104
    %v107 = vpop.xlane.xlu0 %106
    %v108 = vrot.slane %v107, 4
    %v109 = vadd.f32 %v107, %v108
    %v110 = vrot.slane %v109, 2
    %v111 = vadd.f32 %v109, %v110
    %v112 = vrot.slane %v111, 1
    %v113 = vadd.f32 %v111, %v112
    %s114 = vtos %v113
    %v115 = vstv %s114
    %v116 = vadd.f32 %v105, %v115
    %vm117 = vcmask 0
    %118 = vst.msk [vmem:[#allocation2] sm:$0x1] %vm117, %v116
    // Predicated region
    $region22: #{tpu_custom_call.1} parent=1 // pred_check
      %p119 = pneg %p44
    $region23: #{tpu_custom_call.1} parent=1 // pred_check_branch
      %121 = sbr.rel (%p119) target = $region25
    $region24: #{tpu_custom_call.1} parent=1 // pred_region
      %v122 = vld [vmem:[#allocation2] sm:$0x1]
      %v124 = vlaneseq
      %v125 = vshrl.u32 %v124, 7
      %v126 = vsub.s32 0, %v125
      %v127 = vrot.slane %v122, %v126
      %128 = vset.pattern.permute.xlu0 0
      %129 = vperm.xlu0 %128, %v127
      %v130 = vpop.permute.xlu0 %129
      %132 = vst [vmem:[#allocation8] sm:$0xff] %v130
    $region25: #{tpu_custom_call.1} parent=1 // pred_fallthru
      _
    // Predicated region
    $region26: #{tpu_custom_call.1} parent=1 // pred_check
      _
    $region27: #{tpu_custom_call.1} parent=1 // pred_check_branch
      %134 = sbr.rel (0) target = $region29
    $region28: #{tpu_custom_call.1} parent=1 // pred_region
      %s136 = ssub.s32 128, 128
      %137 = vsyncadd [#allocation5], %s136
      %s139 = sshll.u32 [#allocation8], 4
      %s140 = int_to_ptr.vmem [resolvable:$true] %s139
      %142 = dma.vmem_to_hbm [thread:$0]  %s140, 128, %s2, [#allocation5]
    $region29: #{tpu_custom_call.1} parent=1 // pred_fallthru
      _
    // Predicated region
    $region30: #{tpu_custom_call.1} parent=1 // pred_check
      _
    $region31: #{tpu_custom_call.1} parent=1 // pred_check_branch
      %144 = sbr.rel (0) target = $region33
    $region32: #{tpu_custom_call.1} parent=1 // pred_region
      %145 = dma.done [#allocation5], 128
    $region33: #{tpu_custom_call.1} parent=1 // pred_fallthru
      _
    %146 = vsyncpa [#allocation4], 1
    %147 = vsyncpa [#allocation7], 1
    %148 = vsyncpa [#allocation5], 1

</llo_original>
